<compile_context>
chip_gen: v5e
topology: v5e:2x2
jax: 0.10.0
libtpu: 0.0.40
codegen_flags: <defaults>
</compile_context>

<pallas_src>
import functools

import jax
import jax.numpy as jnp
from jax.experimental import pallas as pl
from jax.experimental.pallas import tpu as pltpu


def _ee_head_kernel(x_ref, w1_ref, b1_ref, w2_ref, b2_ref, o_ref, acc_ref,
                    *, inv_thw):
    """One (batch-tile, THW-tile) grid step.

    x_ref : (tn, C, tthw)   activation tile
    w1_ref: (C, C)  b1_ref: (1, C)   first Linear (weight pre-transposed to (in,out))
    w2_ref: (C, K)  b2_ref: (1, K)   second Linear
    o_ref : (tn, K)                  cls_score tile
    acc_ref: (tn, C) f32 VMEM scratch -- running pooled SUM
    """
    k = pl.program_id(1)

    @pl.when(k == 0)
    def _init():
        acc_ref[...] = jnp.zeros_like(acc_ref)

    # Partial global-average-pool: accumulate the SUM over this THW tile.
    acc_ref[...] += jnp.sum(x_ref[...].astype(jnp.float32), axis=-1)

    @pl.when(k == pl.num_programs(1) - 1)
    def _finalize():
        pooled = acc_ref[...] * inv_thw                        # exact mean, once
        h = jnp.dot(pooled, w1_ref[...], preferred_element_type=jnp.float32)
        h = jnp.tanh(h + b1_ref[...])
        out = jnp.dot(h, w2_ref[...], preferred_element_type=jnp.float32)
        o_ref[...] = (out + b2_ref[...]).astype(o_ref.dtype)


def _pick_tiles(n, c, thw, itemsize, budget_bytes):
    """Pick (tn, tthw) with N % tn == 0, THW % tthw == 0 and the x block
    within `budget_bytes` (per pipeline buffer).

    tthw is lane-aligned (multiple of 128) when THW admits such a divisor,
    otherwise the full THW axis.  tn is either N (full batch) or a multiple
    of 8 (sublane constraint on the (tn, K) output block)."""
    lane_divs = sorted((d for d in range(128, thw + 1, 128) if thw % d == 0),
                       reverse=True)
    tthw_cands = lane_divs or [thw]
    tthw = next((d for d in tthw_cands if c * d * itemsize <= budget_bytes),
                tthw_cands[-1])

    tn_cands = [n] + [d for d in range(n - 1, 0, -1)
                      if n % d == 0 and d % 8 == 0]
    tn = next((d for d in tn_cands if d * c * tthw * itemsize <= budget_bytes),
              tn_cands[-1])
    return tn, tthw


def ee_ordinal_head_forward(x, w1, b1, w2, b2, *, vmem_block_budget=6 << 20):
    """EEOrdinalHead.forward (mode='3D', eval).

    x : (N, C, T, H, W) float32/bfloat16
    w1: (C, C) (in, out)   b1: (C,)
    w2: (C, K) (in, out)   b2: (K,)
    Returns cls_score (N, K) float32.
    """
    N, C, T, H, W = x.shape
    K = w2.shape[1]
    thw = T * H * W

    x_flat = x.reshape(N, C, thw)          # glue reshape: no data shuffle in NCDHW
    w1 = w1.astype(jnp.float32)
    w2 = w2.astype(jnp.float32)
    b1_2d = b1.reshape(1, C).astype(jnp.float32)
    b2_2d = b2.reshape(1, K).astype(jnp.float32)

    # TODO(synk): nn.Dropout (dropout_ratio != 0) not implemented — identity in eval.

    itemsize = x_flat.dtype.itemsize
    tn, tthw = _pick_tiles(N, C, thw, itemsize, vmem_block_budget)
    grid = (N // tn, thw // tthw)

    # Scoped-VMEM request: double-buffered x tile + (conservatively doubled)
    # params + accumulator + output tile + margin.
    param_bytes = (w1.size + b1_2d.size + w2.size + b2_2d.size) * 4
    need = (2 * tn * C * tthw * itemsize + 2 * param_bytes
            + tn * C * 4 + 2 * tn * K * 4)
    vmem_limit = max(16 << 20, min(int(need * 1.25) + (1 << 20), 48 << 20))

    cost = pl.CostEstimate(
        flops=int(N * C * thw + 2 * N * C * (C + K)),
        transcendentals=int(N * C),
        bytes_accessed=int(x_flat.size * itemsize + param_bytes + N * K * 4),
    )

    kernel = functools.partial(_ee_head_kernel, inv_thw=float(1.0 / thw))

    return pl.pallas_call(
        kernel,
        out_shape=jax.ShapeDtypeStruct((N, K), jnp.float32),
        grid_spec=pltpu.PrefetchScalarGridSpec(
            num_scalar_prefetch=0,
            grid=grid,
            in_specs=[
                pl.BlockSpec((tn, C, tthw), lambda i, k: (i, 0, k)),
                pl.BlockSpec((C, C), lambda i, k: (0, 0)),
                pl.BlockSpec((1, C), lambda i, k: (0, 0)),
                pl.BlockSpec((C, K), lambda i, k: (0, 0)),
                pl.BlockSpec((1, K), lambda i, k: (0, 0)),
            ],
            out_specs=pl.BlockSpec((tn, K), lambda i, k: (i, 0)),
            scratch_shapes=[pltpu.VMEM((tn, C), jnp.float32)],
        ),
        compiler_params=pltpu.CompilerParams(
            dimension_semantics=("parallel", "arbitrary"),
            vmem_limit_bytes=vmem_limit,
        ),
        cost_estimate=cost,
    )(x_flat, w1, b1_2d, w2, b2_2d)


def _reference(x, w1, b1, w2, b2):
    pooled = jnp.mean(x.astype(jnp.float32), axis=(2, 3, 4))
    h = jnp.tanh(pooled @ w1 + b1)
    return h @ w2 + b2


if __name__ == "__main__":
    # Small shapes consistent with mode='3D' input (N, C, T, H, W).
    N, C, T, H, W = 2, 32, 4, 4, 4
    num_classes = 8
    init_std = 0.01

    key = jax.random.PRNGKey(0)
    kx, kw1, kw2 = jax.random.split(key, 3)

    x = jax.random.normal(kx, (N, C, T, H, W), dtype=jnp.float32)

    # normal_init(std=0.01), zero biases. Weights stored as (in, out).
    w1 = init_std * jax.random.normal(kw1, (C, C), dtype=jnp.float32)
    b1 = jnp.zeros((C,), dtype=jnp.float32)
    w2 = init_std * jax.random.normal(kw2, (C, num_classes), dtype=jnp.float32)
    b2 = jnp.zeros((num_classes,), dtype=jnp.float32)

    out = ee_ordinal_head_forward(x, w1, b1, w2, b2)
    out = jax.block_until_ready(out)

    ref = _reference(x, w1, b1, w2, b2)
    assert out.shape == (N, num_classes)
    assert jnp.allclose(out, ref, atol=1e-5, rtol=1e-5), (
        float(jnp.max(jnp.abs(out - ref))))

    print("KERNEL_OK")
</pallas_src>

<mosaic_0001>
module attributes {stable_mosaic.version = 11 : i64} {
  func.func @_ee_head_kernel(%arg0: i32, %arg1: i32, %arg2: memref<2x32x64xf32, #tpu.memory_space<vmem>>, %arg3: memref<32x32xf32, #tpu.memory_space<vmem>>, %arg4: memref<1x32xf32, #tpu.memory_space<vmem>>, %arg5: memref<32x8xf32, #tpu.memory_space<vmem>>, %arg6: memref<1x8xf32, #tpu.memory_space<vmem>>, %arg7: memref<2x8xf32, #tpu.memory_space<vmem>>, %arg8: memref<2x32xf32, #tpu.memory_space<vmem>>) attributes {dimension_semantics = [#tpu.dimension_semantics<parallel>, #tpu.dimension_semantics<arbitrary>], iteration_bounds = array<i64: 1, 1>, scalar_prefetch = 0 : i64, scratch_operands = 1 : i64, tpu.core_type = #tpu.core_type<tc>, window_params = [{transform_indices = @transform_0, window_bounds = array<i64: 2, 32, 64>}, {pipeline_mode = #tpu.pipeline_mode<synchronous>, transform_indices = @transform_1, window_bounds = array<i64: 32, 32>}, {pipeline_mode = #tpu.pipeline_mode<synchronous>, transform_indices = @transform_2, window_bounds = array<i64: 1, 32>}, {pipeline_mode = #tpu.pipeline_mode<synchronous>, transform_indices = @transform_3, window_bounds = array<i64: 32, 8>}, {pipeline_mode = #tpu.pipeline_mode<synchronous>, transform_indices = @transform_4, window_bounds = array<i64: 1, 8>}, {transform_indices = @transform_5, window_bounds = array<i64: 2, 8>}]} {
    %c0_i32 = arith.constant 0 : i32
    %0 = arith.cmpi eq, %arg1, %c0_i32 : i32
    %1 = arith.extui %0 : i1 to i32
    %c0_i32_0 = arith.constant 0 : i32
    %2 = arith.cmpi ne, %1, %c0_i32_0 : i32
    scf.if %2 {
      %cst_9 = arith.constant 0.000000e+00 : f32
      %11 = vector.broadcast %cst_9 : f32 to vector<2x32xf32>
      %c0_10 = arith.constant 0 : index
      %c0_11 = arith.constant 0 : index
      %12 = vector.load %arg8[%c0_10, %c0_11] : memref<2x32xf32, #tpu.memory_space<vmem>>, vector<2x32xf32>
      tpu.vector_store %arg8[%c0_10, %c0_11], %11 {strides = array<i32>} : memref<2x32xf32, #tpu.memory_space<vmem>>, vector<2x32xf32>,
    } else {
    }
    %c0 = arith.constant 0 : index
    %c0_1 = arith.constant 0 : index
    %3 = vector.load %arg8[%c0, %c0_1] : memref<2x32xf32, #tpu.memory_space<vmem>>, vector<2x32xf32>
    %c0_2 = arith.constant 0 : index
    %c0_3 = arith.constant 0 : index
    %c0_4 = arith.constant 0 : index
    %4 = vector.load %arg2[%c0_2, %c0_3, %c0_4] : memref<2x32x64xf32, #tpu.memory_space<vmem>>, vector<2x32x64xf32>
    %cst = arith.constant dense<0.000000e+00> : vector<2x32xf32>
    %5 = vector.multi_reduction <add>, %4, %cst [2] : vector<2x32x64xf32> to vector<2x32xf32>
    %6 = arith.addf %3, %5 : vector<2x32xf32>
    %c0_5 = arith.constant 0 : index
    %c0_6 = arith.constant 0 : index
    %7 = vector.load %arg8[%c0_5, %c0_6] : memref<2x32xf32, #tpu.memory_space<vmem>>, vector<2x32xf32>
    tpu.vector_store %arg8[%c0_5, %c0_6], %6 {strides = array<i32>} : memref<2x32xf32, #tpu.memory_space<vmem>>, vector<2x32xf32>,
    %c0_i32_7 = arith.constant 0 : i32
    %8 = arith.cmpi eq, %arg1, %c0_i32_7 : i32
    %9 = arith.extui %8 : i1 to i32
    %c0_i32_8 = arith.constant 0 : i32
    %10 = arith.cmpi ne, %9, %c0_i32_8 : i32
    scf.if %10 {
      %c0_9 = arith.constant 0 : index
      %c0_10 = arith.constant 0 : index
      %11 = vector.load %arg8[%c0_9, %c0_10] : memref<2x32xf32, #tpu.memory_space<vmem>>, vector<2x32xf32>
      %cst_11 = arith.constant 1.562500e-02 : f32
      %12 = vector.broadcast %cst_11 : f32 to vector<2x32xf32>
      %13 = arith.mulf %11, %12 : vector<2x32xf32>
      %c0_12 = arith.constant 0 : index
      %c0_13 = arith.constant 0 : index
      %14 = vector.load %arg3[%c0_12, %c0_13] : memref<32x32xf32, #tpu.memory_space<vmem>>, vector<32x32xf32>
      %cst_14 = arith.constant dense<0.000000e+00> : vector<2x32xf32>
      %15 = tpu.matmul %13, %14, %cst_14 {dimension_numbers = #tpu.dot_dimension_numbers<[1], [0], [0], [1], [0, 0, 1, 1], [], []>} : vector<2x32xf32>, vector<32x32xf32>, vector<2x32xf32> -> vector<2x32xf32>
      %c0_15 = arith.constant 0 : index
      %c0_16 = arith.constant 0 : index
      %16 = vector.load %arg4[%c0_15, %c0_16] : memref<1x32xf32, #tpu.memory_space<vmem>>, vector<1x32xf32>
      %17 = vector.broadcast %16 : vector<1x32xf32> to vector<2x32xf32>
      %18 = arith.addf %15, %17 : vector<2x32xf32>
      %19 = math.tanh %18 : vector<2x32xf32>
      %c0_17 = arith.constant 0 : index
      %c0_18 = arith.constant 0 : index
      %20 = vector.load %arg5[%c0_17, %c0_18] : memref<32x8xf32, #tpu.memory_space<vmem>>, vector<32x8xf32>
      %cst_19 = arith.constant dense<0.000000e+00> : vector<2x8xf32>
      %21 = tpu.matmul %19, %20, %cst_19 {dimension_numbers = #tpu.dot_dimension_numbers<[1], [0], [0], [1], [0, 0, 1, 1], [], []>} : vector<2x32xf32>, vector<32x8xf32>, vector<2x8xf32> -> vector<2x8xf32>
      %c0_20 = arith.constant 0 : index
      %c0_21 = arith.constant 0 : index
      %22 = vector.load %arg6[%c0_20, %c0_21] : memref<1x8xf32, #tpu.memory_space<vmem>>, vector<1x8xf32>
      %23 = vector.broadcast %22 : vector<1x8xf32> to vector<2x8xf32>
      %24 = arith.addf %21, %23 : vector<2x8xf32>
      %c0_22 = arith.constant 0 : index
      %c0_23 = arith.constant 0 : index
      %25 = vector.load %arg7[%c0_22, %c0_23] : memref<2x8xf32, #tpu.memory_space<vmem>>, vector<2x8xf32>
      tpu.vector_store %arg7[%c0_22, %c0_23], %24 {strides = array<i32>} : memref<2x8xf32, #tpu.memory_space<vmem>>, vector<2x8xf32>,
    } else {
    }
    return
  }
  func.func @transform_0(%arg0: i32, %arg1: i32) -> (i32, i32, i32) {
    %c0_i32 = arith.constant 0 : i32
    %c0_i32_0 = arith.constant 0 : i32
    return %arg0, %c0_i32, %arg1 : i32, i32, i32
  }
  func.func @transform_1(%arg0: i32, %arg1: i32) -> (i32, i32) {
    %c0_i32 = arith.constant 0 : i32
    %c0_i32_0 = arith.constant 0 : i32
    %c0_i32_1 = arith.constant 0 : i32
    return %c0_i32, %c0_i32_0 : i32, i32
  }
  func.func @transform_2(%arg0: i32, %arg1: i32) -> (i32, i32) {
    %c0_i32 = arith.constant 0 : i32
    %c0_i32_0 = arith.constant 0 : i32
    %c0_i32_1 = arith.constant 0 : i32
    return %c0_i32, %c0_i32_0 : i32, i32
  }
  func.func @transform_3(%arg0: i32, %arg1: i32) -> (i32, i32) {
    %c0_i32 = arith.constant 0 : i32
    %c0_i32_0 = arith.constant 0 : i32
    %c0_i32_1 = arith.constant 0 : i32
    return %c0_i32, %c0_i32_0 : i32, i32
  }
  func.func @transform_4(%arg0: i32, %arg1: i32) -> (i32, i32) {
    %c0_i32 = arith.constant 0 : i32
    %c0_i32_0 = arith.constant 0 : i32
    %c0_i32_1 = arith.constant 0 : i32
    return %c0_i32, %c0_i32_0 : i32, i32
  }
  func.func @transform_5(%arg0: i32, %arg1: i32) -> (i32, i32) {
    %c0_i32 = arith.constant 0 : i32
    %c0_i32_0 = arith.constant 0 : i32
    return %arg0, %c0_i32 : i32, i32
  }
}

</mosaic_0001>

<llo_original>
// kernel: tpu_custom_call.1
$region0: #{tpu_custom_call.1}
  #allocation0 [shape = 'u32[]', space=smem, size = 0x4, offset = 0x4, fixed_abs, tag = 'smem constant byte address 0x4 - core index']
  #allocation1 [shape = 'u32[72,128]{1,0:T(1,128)}', space=vmem, size = 0x9000, scoped, tag = 'internal scratch']
  #allocation2 [shape = 'f32[2,32]{1,0:T(2,128)}', space=vmem, size = 0x400, scoped, tag = 'scratch operand']
  %s0 = inlined_call_operand.hbm [shape: f32[2,32,64], index: 0, kind: input, shape index: {}]
  %s1 = inlined_call_operand.vmem [shape: f32[32,32], index: 1, kind: input, shape index: {}]
  %s2 = inlined_call_operand.vmem [shape: f32[1,32], index: 2, kind: input, shape index: {}]
  %s3 = inlined_call_operand.vmem [shape: f32[32,8], index: 3, kind: input, shape index: {}]
  %s4 = inlined_call_operand.vmem [shape: f32[1,8], index: 4, kind: input, shape index: {}]
  %s5 = inlined_call_operand.hbm [shape: f32[2,8], index: 5, kind: output, shape index: {}]
  %s6 = sld [smem:[#allocation0]]
  $region42: #{tpu_custom_call.1} parent=0
    _
  %s8 = ssub.s32 1, %s6
  %s9 = scalar_select 0, %s8, %s6
  $region1: #{tpu_custom_call.1} parent=0
    #allocation3 [shape = 'u8[32768]{0}', space=vmem, size = 0x8000, scoped, tag = 'input window, operand 0, single buffered']
    #allocation4 [shape = 's32[1]{0}', space=sflag, size = 0x4, scoped, tag = 'scoped memory for tpu_custom_call.1']
    #allocation5 [shape = 's32[1]{0}', space=sflag, size = 0x4, scoped, tag = 'scoped memory for tpu_custom_call.1']
    #allocation6 [shape = 'u8[1024]{0}', space=vmem, size = 0x400, scoped, tag = 'output window, operand 0, single buffered']
    %10 = vsyncpa [#allocation4], 0
    %11 = vsyncpa [#allocation5], 0
    // Predicated region
    $region2: #{tpu_custom_call.1} parent=1 // pred_check
      _
    $region3: #{tpu_custom_call.1} parent=1 // pred_check_branch
      %13 = sbr.rel (0) target = $region5
    $region4: #{tpu_custom_call.1} parent=1 // pred_region
      %15 = vsyncadd [#allocation4], 0
      %s16 = sshll.u32 %s0, 4
      %s17 = int_to_ptr.hbm [resolvable:$true] %s16
      %s18 = sshll.u32 [#allocation3], 4
      %s19 = int_to_ptr.vmem [resolvable:$true] %s18
      %24 = dma.hbm_to_vmem [thread:$0]  %s17, 1024, %s19, [#allocation4], 128, 128, 8
    $region5: #{tpu_custom_call.1} parent=1 // pred_fallthru
      _
    // Predicated region
    $region6: #{tpu_custom_call.1} parent=1 // pred_check
      _
    $region7: #{tpu_custom_call.1} parent=1 // pred_check_branch
      %26 = sbr.rel (0) target = $region9
    $region8: #{tpu_custom_call.1} parent=1 // pred_region
      _
    $region9: #{tpu_custom_call.1} parent=1 // pred_fallthru
      _
    // Predicated region
    $region10: #{tpu_custom_call.1} parent=1 // pred_check
      _
    $region11: #{tpu_custom_call.1} parent=1 // pred_check_branch
      %28 = sbr.rel (0) target = $region13
    $region12: #{tpu_custom_call.1} parent=1 // pred_region
      _
    $region13: #{tpu_custom_call.1} parent=1 // pred_fallthru
      _
    // Predicated region
    $region14: #{tpu_custom_call.1} parent=1 // pred_check
      _
    $region15: #{tpu_custom_call.1} parent=1 // pred_check_branch
      %30 = sbr.rel (0) target = $region17
    $region16: #{tpu_custom_call.1} parent=1 // pred_region
      _
    $region17: #{tpu_custom_call.1} parent=1 // pred_fallthru
      _
    // Predicated region
    $region18: #{tpu_custom_call.1} parent=1 // pred_check
      _
    $region19: #{tpu_custom_call.1} parent=1 // pred_check_branch
      %32 = sbr.rel (0) target = $region21
    $region20: #{tpu_custom_call.1} parent=1 // pred_region
      _
    $region21: #{tpu_custom_call.1} parent=1 // pred_fallthru
      _
    // Predicated region
    $region22: #{tpu_custom_call.1} parent=1 // pred_check
      _
    $region23: #{tpu_custom_call.1} parent=1 // pred_check_branch
      %34 = sbr.rel (0) target = $region25
    $region24: #{tpu_custom_call.1} parent=1 // pred_region
      %36 = dma.done [#allocation4], 1024
    $region25: #{tpu_custom_call.1} parent=1 // pred_fallthru
      _
    %p37 = scmp.eq.s32.totalorder 0, 0
    // Predicated region
    $region26: #{tpu_custom_call.1} parent=1 // pred_check
      %p38 = pneg %p37
    $region27: #{tpu_custom_call.1} parent=1 // pred_check_branch
      %40 = sbr.rel (%p38) target = $region29
    $region28: #{tpu_custom_call.1} parent=1 // pred_region
      %vm41 = vcmask 254976
      %42 = vst.msk [vmem:[#allocation2] sm:$0x3] %vm41, 0.0
    $region29: #{tpu_custom_call.1} parent=1 // pred_fallthru
      _
    %v43 = vld [vmem:[#allocation2] sm:$0x3]
    %v44 = vld [vmem:[#allocation3] sm:$0xff]
    %v45 = vld [vmem:[#allocation3 + $0x8] sm:$0xff]
    %v46 = vld [vmem:[#allocation3 + $0x10] sm:$0xff]
    %v47 = vld [vmem:[#allocation3 + $0x18] sm:$0xff]
    %v48 = vld [vmem:[#allocation3 + $0x20] sm:$0xff]
    %v49 = vld [vmem:[#allocation3 + $0x28] sm:$0xff]
    %v50 = vld [vmem:[#allocation3 + $0x30] sm:$0xff]
    %v51 = vld [vmem:[#allocation3 + $0x38] sm:$0xff]
    %vm52 = vcmask 523264
    %v53 = vsel %vm52, %v44, 0.0
    %54 = vadd.xlane.f32.xlu0 %v53
    %v55 = vpop.xlane.xlu0 %54
    %v56 = vsel %vm52, %v45, 0.0
    %57 = vadd.xlane.f32.xlu0 %v56
    %v58 = vpop.xlane.xlu0 %57
    %v59 = vsel %vm52, %v46, 0.0
    %60 = vadd.xlane.f32.xlu0 %v59
    %v61 = vpop.xlane.xlu0 %60
    %v62 = vsel %vm52, %v47, 0.0
    %63 = vadd.xlane.f32.xlu0 %v62
    %v64 = vpop.xlane.xlu0 %63
    %v65 = vsel %vm52, %v48, 0.0
    %66 = vadd.xlane.f32.xlu0 %v65
    %v67 = vpop.xlane.xlu0 %66
    %v68 = vsel %vm52, %v49, 0.0
    %69 = vadd.xlane.f32.xlu0 %v68
    %v70 = vpop.xlane.xlu0 %69
    %v71 = vsel %vm52, %v50, 0.0
    %72 = vadd.xlane.f32.xlu0 %v71
    %v73 = vpop.xlane.xlu0 %72
    %v74 = vsel %vm52, %v51, 0.0
    %75 = vadd.xlane.f32.xlu0 %v74
    %v76 = vpop.xlane.xlu0 %75
    %v85 = vlaneseq
    %v86 = vand.u32 %v85, 127
    %v87 = vperm.slane %v55, %v86
    %v88 = vadd.s32 %v86, 4294967288
    %v89 = vperm.slane %v58, %v88
    %vm90 = vcmask 130112
    %v91 = vsel %vm90, %v89, %v87
    %v92 = vadd.s32 %v86, 4294967280
    %v93 = vperm.slane %v61, %v92
    %vm94 = vcmask 195712
    %v95 = vsel %vm94, %v93, %v91
    %v96 = vadd.s32 %v86, 4294967272
    %v97 = vperm.slane %v64, %v96
    %vm98 = vcmask 261312
    %v99 = vsel %vm98, %v97, %v95
    %v100 = vperm.slane %v67, %v86
    %v101 = vperm.slane %v70, %v88
    %v102 = vsel %vm90, %v101, %v100
    %v103 = vperm.slane %v73, %v92
    %v104 = vsel %vm94, %v103, %v102
    %v105 = vperm.slane %v76, %v96
    %v106 = vsel %vm98, %v105, %v104
    %vm107 = vcmask 1041409
    %v108 = vsel %vm107, %v106, %v99
    %v110 = vadd.f32 %v43, %v108
    %vm111 = vcmask 254976
    %112 = vst.msk [vmem:[#allocation2] sm:$0x3] %vm111, %v110
    // Predicated region
    $region30: #{tpu_custom_call.1} parent=1 // pred_check
      %p113 = pneg %p37
    $region31: #{tpu_custom_call.1} parent=1 // pred_check_branch
      %115 = sbr.rel (%p113) target = $region33
    $region32: #{tpu_custom_call.1} parent=1 // pred_region
      %v116 = vld [vmem:[#allocation2] sm:$0x3]
      %v117 = vmul.f32 %v116, 0.015625
      %v118 = vld [vmem:[%s1] sm:$0xff]
      %v119 = vld [vmem:[%s1 + $0x8] sm:$0xff]
      %v120 = vld [vmem:[%s1 + $0x10] sm:$0xff]
      %v121 = vld [vmem:[%s1 + $0x18] sm:$0xff]
      %v122 = vld [vmem:[%s2] sm:$0x1]
      %v124 = vperm.slane %v122, 0
      %vm126 = vcmask 261120
      %v128 = vsel %vm126, %v117, 0
      %130 = vmatpush.msra.mxu0 0.0
      %131 = vmatpush.msra.mxu0 0.0
      %132 = vmatpush.msra.mxu0 0.0
      %133 = vmatpush.msra.mxu0 0.0
      %134 = vmatpush.msra.mxu0 0.0
      %135 = vmatpush.msra.mxu0 0.0
      %136 = vmatpush.msra.mxu0 0.0
      %137 = vmatpush.msra.mxu0 0.0
      %138 = vmatpush.msra.mxu0 0.0
      %139 = vmatpush.msra.mxu0 0.0
      %140 = vmatpush.msra.mxu0 0.0
      %141 = vmatpush.msra.mxu0 0.0
      %142 = vmatpush.msra.mxu0 %v121
      %143 = vmatpush.msra.mxu0 %v120
      %144 = vmatpush.msra.mxu0 %v119
      %145 = vmatpush.msra.mxu0 %v118
      %146 = vmatmul.f32.gmra.mxu0 %v128
      %v147 = vpop.f32.mrf.mxu0
      %v148 = vadd.f32 %v124, %v147
      %149 = vdwg.mxu0
      %v150 = vtanh.pop %v148
      %v151 = vld [vmem:[%s3] sm:$0xff]
      %v152 = vld [vmem:[%s3 + $0x8] sm:$0xff]
      %v153 = vld [vmem:[%s3 + $0x10] sm:$0xff]
      %v154 = vld [vmem:[%s3 + $0x18] sm:$0xff]
      %v155 = vld [vmem:[%s4] sm:$0x1]
      %v157 = vperm.slane %v155, 0
      %v160 = vsel %vm126, %v150, 0
      %162 = vmatpush.msra.mxu0 0.0
      %163 = vmatpush.msra.mxu0 0.0
      %164 = vmatpush.msra.mxu0 0.0
      %165 = vmatpush.msra.mxu0 0.0
      %166 = vmatpush.msra.mxu0 0.0
      %167 = vmatpush.msra.mxu0 0.0
      %168 = vmatpush.msra.mxu0 0.0
      %169 = vmatpush.msra.mxu0 0.0
      %170 = vmatpush.msra.mxu0 0.0
      %171 = vmatpush.msra.mxu0 0.0
      %172 = vmatpush.msra.mxu0 0.0
      %173 = vmatpush.msra.mxu0 0.0
      %174 = vmatpush.msra.mxu0 %v154
      %175 = vmatpush.msra.mxu0 %v153
      %176 = vmatpush.msra.mxu0 %v152
      %177 = vmatpush.msra.mxu0 %v151
      %178 = vmatmul.f32.gmra.mxu0 %v160
      %v179 = vpop.f32.mrf.mxu0
      %v180 = vadd.f32 %v157, %v179
      %181 = vdwg.mxu0
      %vm182 = vcmask 58368
      %183 = vst.msk [vmem:[#allocation6] sm:$0x3] %vm182, %v180
    $region33: #{tpu_custom_call.1} parent=1 // pred_fallthru
      _
    // Predicated region
    $region34: #{tpu_custom_call.1} parent=1 // pred_check
      _
    $region35: #{tpu_custom_call.1} parent=1 // pred_check_branch
      %185 = sbr.rel (0) target = $region37
    $region36: #{tpu_custom_call.1} parent=1 // pred_region
      %187 = vsyncadd [#allocation5], 0
      %s189 = sshll.u32 [#allocation6], 4
      %s190 = int_to_ptr.vmem [resolvable:$true] %s189
      %s191 = sshll.u32 %s5, 4
      %s192 = int_to_ptr.hbm [resolvable:$true] %s191
      %194 = dma.vmem_to_hbm [thread:$0]  %s190, 32, %s192, [#allocation5]
    $region37: #{tpu_custom_call.1} parent=1 // pred_fallthru
      _
    // Predicated region
    $region38: #{tpu_custom_call.1} parent=1 // pred_check
      _
    $region39: #{tpu_custom_call.1} parent=1 // pred_check_branch
      %196 = sbr.rel (0) target = $region41
    $region40: #{tpu_custom_call.1} parent=1 // pred_region
      %198 = dma.done [#allocation5], 32
    $region41: #{tpu_custom_call.1} parent=1 // pred_fallthru
      _
    %199 = vsyncpa [#allocation4], 1
    %200 = vsyncpa [#allocation5], 1

</llo_original>
